<compile_context>
chip_gen: v7x
topology: tpu7x:2x2x1
jax: 0.10.0
libtpu: 0.0.40
codegen_flags: <defaults>
</compile_context>

<pallas_src>
import functools

import jax
import jax.numpy as jnp
from jax import lax
from jax.experimental import pallas as pl
from jax.experimental.pallas import tpu as pltpu


_VMEM_LIMIT = 32 * 1024 * 1024   # safe scoped-VMEM budget on v5e/v6e/v7x


# --------------------------------------------------------------------------
# Kernel 1: fused multi-head Linear + per-head log_softmax (lane-dense, Tpad=128)
# --------------------------------------------------------------------------
def _fc_logsoftmax_kernel(x_ref, w_ref, b_ref, o_ref, *, head_slices):
    # x_ref: (TM, H) bf16, w_ref: (H, Tpad) bf16, b_ref: (1, Tpad) f32,
    # o_ref: (TM, Tpad) bf16.  head_slices: static ((offset, size), ...).
    y = jnp.dot(x_ref[...], w_ref[...], preferred_element_type=jnp.float32)
    y = y + b_ref[...]                                            # (TM, Tpad) f32
    col = lax.broadcasted_iota(jnp.int32, y.shape, 1)
    neg = jnp.float32(-1e30)

    # Per-head masked max merged into one (TM,128) max map -> a single shared
    # exp pass over the tile (EUP is one VLIW slot; don't pay it per head).
    masks, maxes = [], []
    max_map = jnp.zeros_like(y)
    for off, size in head_slices:                                 # static loop
        hmask = jnp.logical_and(col >= off, col < off + size)
        m = jnp.max(jnp.where(hmask, y, neg), axis=-1, keepdims=True)
        masks.append(hmask)
        maxes.append(m)
        max_map = jnp.where(hmask, m, max_map)
    e = jnp.exp(y - max_map)                                      # one exp pass

    out = jnp.zeros_like(y)
    for hmask, m in zip(masks, maxes):
        s = jnp.sum(jnp.where(hmask, e, 0.0), axis=-1, keepdims=True)
        lse = m + jnp.log(s)
        out = jnp.where(hmask, y - lse, out)
    o_ref[...] = out.astype(o_ref.dtype)                          # bf16 store


def _pick_row_tile(m):
    # Largest lane-dense row tile that divides M (avoids padding the slab).
    for tm in (1024, 512, 256, 128, 64, 32, 16, 8):
        if m % tm == 0:
            return tm, m
    if m <= 1024:
        return m, m                       # single full block, no pad
    tm = 512
    return tm, ((m + tm - 1) // tm) * tm  # rare fallback: pad ragged tail


def fused_fc_logsoftmax(x_flat, w_fused_t, b_fused, head_slices):
    """x_flat: (M,H) bf16, w_fused_t: (H,Tpad) bf16, b_fused: (1,Tpad) f32.

    Returns (M, Tpad) bf16 with each head's log_softmax in its column range
    (padded columns are 0 and never read downstream)."""
    M, H = x_flat.shape
    Tpad = w_fused_t.shape[1]
    TM, Mp = _pick_row_tile(M)
    if Mp != M:
        x_flat = jnp.pad(x_flat, ((0, Mp - M), (0, 0)))
    out = pl.pallas_call(
        functools.partial(_fc_logsoftmax_kernel, head_slices=tuple(head_slices)),
        out_shape=jax.ShapeDtypeStruct((Mp, Tpad), jnp.bfloat16),
        grid=(Mp // TM,),
        in_specs=[
            pl.BlockSpec((TM, H), lambda i: (i, 0)),
            pl.BlockSpec((H, Tpad), lambda i: (0, 0)),
            pl.BlockSpec((1, Tpad), lambda i: (0, 0)),
        ],
        out_specs=pl.BlockSpec((TM, Tpad), lambda i: (i, 0)),
        compiler_params=pltpu.CompilerParams(
            dimension_semantics=("parallel",),
            vmem_limit_bytes=_VMEM_LIMIT),
    )(x_flat, w_fused_t, b_fused)
    return out if Mp == M else out[:M]


# --------------------------------------------------------------------------
# Kernel 2: fused multi-head CRF negative log-likelihood
#           (fastNLP ConditionalRandomField.forward, both heads in one call)
# --------------------------------------------------------------------------
def _crf_fused_loss_kernel(logits_ref, tags_ref, mask_ref, *refs, head_slices):
    # logits_ref: (S, TB, 128) bf16  time-major, lane-dense, heads side by side
    # tags_ref:   (S, TB, n_heads) i32   gold tags (stacked over heads)
    # mask_ref:   (S, TB, 1) f32         1.0 = real token, 0.0 = pad
    # refs = [trans_h (T,T), start_h (1,T), end_h (1,T)] * n_heads + [loss_ref (TB,n_heads)]
    n_heads = len(head_slices)
    loss_ref = refs[3 * n_heads]
    S, TB, _ = logits_ref.shape

    mask = mask_ref[...]                                        # (S,TB,1)
    tags = tags_ref[...]                                        # (S,TB,n_heads)
    logits_f = logits_ref[...].astype(jnp.float32)              # (S,TB,128)

    transs = [refs[3 * h][...] for h in range(n_heads)]          # (T,T)
    starts = [refs[3 * h + 1][...] for h in range(n_heads)]      # (1,T)
    ends = [refs[3 * h + 2][...] for h in range(n_heads)]        # (1,T)
    # trans broadcast hoisted out of the serial loop (JAX does not CSE it).
    trans_bs = [jnp.broadcast_to(t[None, :, :], (TB,) + t.shape) for t in transs]

    # ----- log-partition (forward recursion), both heads carried together:
    #   new_alpha_k = LSE_j(alpha_j + trans[j,k]) + emit_k
    alphas0 = tuple(
        logits_f[0][:, off:off + sz] + starts[h]
        for h, (off, sz) in enumerate(head_slices))

    def body(i, alphas):
        row = logits_ref[i].astype(jnp.float32)                  # (TB,128) one load
        mi = mask_ref[i]                                         # (TB,1)
        new = []
        for h, (off, sz) in enumerate(head_slices):
            alpha = alphas[h]
            emit = row[:, off:off + sz]                          # static lane slice
            tmp = alpha[:, :, None] + trans_bs[h]                # (TB,T,T)
            mmax = jnp.max(tmp, axis=1, keepdims=True)           # (TB,1,T)
            lse = jnp.log(jnp.sum(jnp.exp(tmp - mmax), axis=1)) + mmax[:, 0, :]
            na = lse + emit                                      # add emit after LSE
            new.append(jnp.where(mi > 0.5, na, alpha))
        return tuple(new)

    alphas = lax.fori_loop(1, S, body, alphas0,
                           unroll=max(1, min(8, S - 1)))         # partial unroll

    # last valid position selector, shared by all heads.
    # NOTE: assumes left-aligned mask (position 0 real, S >= 2), like fastNLP.
    last_idx = jnp.sum(mask, axis=0).astype(jnp.int32) - 1       # (TB,1)
    pos_iota = lax.broadcasted_iota(jnp.int32, (S, TB, 1), 0)
    last_sel = (pos_iota == last_idx[None, :, :]).astype(jnp.float32)

    losses = []
    for h, (off, sz) in enumerate(head_slices):
        trans_h, start_h, end_h = transs[h], starts[h], ends[h]

        # log-partition
        alpha = alphas[h] + end_h                                # (TB,T)
        amax = jnp.max(alpha, axis=1, keepdims=True)
        norm = jnp.log(jnp.sum(jnp.exp(alpha - amax), axis=1, keepdims=True)) + amax

        # gold-path score
        logits_h = logits_f[:, :, off:off + sz]                  # (S,TB,T)
        tags_h = tags[:, :, h:h + 1]                             # (S,TB,1)
        tag_iota = lax.broadcasted_iota(jnp.int32, (S, TB, sz), 2)
        oh = (tag_iota == tags_h).astype(jnp.float32)            # (S,TB,T)

        emit_gold = jnp.sum(
            jnp.sum(logits_h * oh, axis=2, keepdims=True) * mask, axis=0)   # (TB,1)

        if S >= 2:
            prev_oh = oh[:S - 1]                                 # (S-1,TB,T)
            next_oh = oh[1:]
            # trans_row[s,b,:] = trans[tags[s,b], :] via static unroll over the
            # previous tag -> temps bounded at (S-1,TB,T), no 4-D intermediate.
            trans_row = jnp.zeros_like(prev_oh)
            for j in range(sz):                                  # static loop, T<=7
                trans_row = trans_row + prev_oh[:, :, j:j + 1] * trans_h[j][None, None, :]
            step_sc = jnp.sum(trans_row * next_oh, axis=2, keepdims=True)   # (S-1,TB,1)
            trans_gold = jnp.sum(step_sc * mask[1:], axis=0)                # (TB,1)
        else:
            trans_gold = jnp.zeros_like(emit_gold)

        start_gold = jnp.sum(oh[0] * start_h, axis=1, keepdims=True)        # (TB,1)
        last_tag_oh = jnp.sum(oh * last_sel, axis=0)                        # (TB,T)
        end_gold = jnp.sum(last_tag_oh * end_h, axis=1, keepdims=True)      # (TB,1)

        losses.append(norm - (emit_gold + trans_gold + start_gold + end_gold))

    loss_ref[...] = jnp.concatenate(losses, axis=1)              # (TB, n_heads)


def crf_fused_nll(logits_t, tags_t, mask_t, crf_params, head_slices):
    """logits_t: (S,B,128) bf16 time-major, tags_t: (S,B,n_heads) i32,
    mask_t: (S,B,1) f32.  crf_params: per head (trans (T,T), start (1,T), end (1,T)).
    Returns per-sample per-head NLL, shape (B, n_heads)."""
    S, B, Tpad = logits_t.shape
    n_heads = len(head_slices)
    # >=2 batch blocks whenever the (8,128) block rule allows, so both v7x
    # TensorCores get work from dimension_semantics=("parallel",).
    TB = 8 if (B % 8 == 0 and B >= 16) else B

    in_specs = [
        pl.BlockSpec((S, TB, Tpad), lambda i: (0, i, 0)),
        pl.BlockSpec((S, TB, n_heads), lambda i: (0, i, 0)),
        pl.BlockSpec((S, TB, 1), lambda i: (0, i, 0)),
    ]
    param_args = []
    for (trans, start, end) in crf_params:
        T = trans.shape[0]
        in_specs.append(pl.BlockSpec((T, T), lambda i: (0, 0)))
        in_specs.append(pl.BlockSpec((1, T), lambda i: (0, 0)))
        in_specs.append(pl.BlockSpec((1, T), lambda i: (0, 0)))
        param_args.extend([trans, start, end])

    out = pl.pallas_call(
        functools.partial(_crf_fused_loss_kernel, head_slices=tuple(head_slices)),
        out_shape=jax.ShapeDtypeStruct((B, n_heads), jnp.float32),
        grid=(B // TB,),
        in_specs=in_specs,
        out_specs=pl.BlockSpec((TB, n_heads), lambda i: (i, 0)),
        compiler_params=pltpu.CompilerParams(
            dimension_semantics=("parallel",),
            vmem_limit_bytes=_VMEM_LIMIT),
    )(logits_t, tags_t, mask_t, *param_args)
    return out


# --------------------------------------------------------------------------
# One-time parameter prep (hoisted out of the per-step forward)
# --------------------------------------------------------------------------
def prepare_bert_crf_params(embed_table, head_params):
    tag_sizes = [p[0].shape[0] for p in head_params]
    offsets, off = [], 0
    for t in tag_sizes:
        offsets.append(off)
        off += t
    t_total = off
    assert t_total <= 128, "fused tag axis must fit one 128-lane group"
    t_pad = 128                                          # lane-dense fused tag axis

    w_cat = jnp.concatenate([w.T for (w, _, _, _, _) in head_params], axis=1)
    b_cat = jnp.concatenate([b for (_, b, _, _, _) in head_params], axis=0)
    w_fused_t = jnp.pad(w_cat, ((0, 0), (0, t_pad - t_total))).astype(jnp.bfloat16)
    b_fused = jnp.pad(b_cat, (0, t_pad - t_total)).reshape(1, t_pad).astype(jnp.float32)

    crf_params = []
    for (w, b, trans, start, end) in head_params:
        T = w.shape[0]
        crf_params.append((trans.astype(jnp.float32),
                           start.reshape(1, T).astype(jnp.float32),
                           end.reshape(1, T).astype(jnp.float32)))

    return {
        "embed_bf16": embed_table.astype(jnp.bfloat16),  # bf16 once -> gather is bf16
        "w_fused_t": w_fused_t,
        "b_fused": b_fused,
        "crf_params": crf_params,
        "head_slices": tuple(zip(offsets, tag_sizes)),
        "t_pad": t_pad,
    }


# --------------------------------------------------------------------------
# BertCRF forward (training branch: targets provided -> {'loss': ...})
# --------------------------------------------------------------------------
def bert_crf_forward(words, targets, params):
    B, S = words.shape
    t_pad = params["t_pad"]

    mask_t = (words != 0).T.astype(jnp.float32)[:, :, None]               # (S,B,1)
    tags_t = jnp.stack([t.T.astype(jnp.int32) for t in targets], axis=-1)  # (S,B,n)

    # time-major embedding lookup in bf16 -> FC output already in the CRF layout.
    # TODO(synk): fuse this gather into the FC kernel (scalar-prefetch word ids
    #             to SMEM, embed table in pl.ANY, manual double-buffered row DMA)
    #             to drop the (S,B,H) activation HBM round trip.
    x_t = jnp.take(params["embed_bf16"], words.T, axis=0)                  # (S,B,H) bf16
    x_flat = x_t.reshape(S * B, params["embed_bf16"].shape[1])

    logs = fused_fc_logsoftmax(x_flat, params["w_fused_t"], params["b_fused"],
                               params["head_slices"])                      # (S*B,128) bf16
    logs_t = logs.reshape(S, B, t_pad)                                     # time-major

    losses = crf_fused_nll(logs_t, tags_t, mask_t,
                           params["crf_params"], params["head_slices"])    # (B,n_heads)
    return {"loss": jnp.sum(losses, axis=1)}                               # (B,)


# --------------------------------------------------------------------------
# Pure-JAX reference for verification
# --------------------------------------------------------------------------
def _crf_nll_ref(logits, tags, mask, trans, start, end):
    B, S, T = logits.shape
    maskf = mask.astype(jnp.float32)
    alpha = logits[:, 0, :] + start[None, :]
    for i in range(1, S):
        emit = logits[:, i, :]
        tmp = alpha[:, :, None] + trans[None, :, :] + emit[:, None, :]
        new_alpha = jax.scipy.special.logsumexp(tmp, axis=1)
        alpha = jnp.where(maskf[:, i:i + 1] > 0.5, new_alpha, alpha)
    alpha = alpha + end[None, :]
    norm = jax.scipy.special.logsumexp(alpha, axis=1)

    emit_sc = jnp.take_along_axis(logits, tags[:, :, None], axis=2)[:, :, 0] * maskf
    trans_sc = trans[tags[:, :-1], tags[:, 1:]] * maskf[:, 1:]
    last_idx = maskf.sum(1).astype(jnp.int32) - 1
    last_tags = jnp.take_along_axis(tags, last_idx[:, None], axis=1)[:, 0]
    gold = (emit_sc.sum(1) + trans_sc.sum(1) + start[tags[:, 0]] + end[last_tags])
    return norm - gold


def _forward_ref(words, targets, embed_table, head_params):
    mask = words != 0
    x = jnp.take(embed_table, words, axis=0)
    losses = []
    for (w, b, trans, start, end), tgt in zip(head_params, targets):
        logits = jax.nn.log_softmax(x @ w.T + b, axis=-1)
        losses.append(_crf_nll_ref(logits, tgt, mask, trans, start, end))
    return sum(losses)


if __name__ == "__main__":
    B, S, H, V = 2, 8, 32, 50
    tag_sizes = [5, 7]               # two tagging heads (target, target1)

    key = jax.random.PRNGKey(0)
    keys = jax.random.split(key, 16)

    embed_table = (0.02 * jax.random.normal(keys[0], (V, H))).astype(jnp.float32)

    head_params = []
    for i, T in enumerate(tag_sizes):
        kw, kb, kt, ks, ke = jax.random.split(keys[1 + i], 5)
        w = (jax.random.normal(kw, (T, H)) / jnp.sqrt(H)).astype(jnp.float32)   # Linear weight (T, H)
        b = (0.01 * jax.random.normal(kb, (T,))).astype(jnp.float32)            # Linear bias (T,)
        trans = (0.1 * jax.random.normal(kt, (T, T))).astype(jnp.float32)       # CRF trans_m
        start = (0.1 * jax.random.normal(ks, (T,))).astype(jnp.float32)         # CRF start_scores
        end = (0.1 * jax.random.normal(ke, (T,))).astype(jnp.float32)           # CRF end_scores
        head_params.append((w, b, trans, start, end))

    # token ids, 0 = padding; sample 1 has two padded positions at the tail
    words = jax.random.randint(keys[10], (B, S), 1, V, dtype=jnp.int32)
    words = words.at[1, 6:].set(0)

    targets = [
        jax.random.randint(keys[11 + i], (B, S), 0, T, dtype=jnp.int32)
        for i, T in enumerate(tag_sizes)
    ]

    params = prepare_bert_crf_params(embed_table, head_params)   # one-time prep
    out = bert_crf_forward(words, targets, params)
    loss = jax.block_until_ready(out["loss"])

    ref = jax.block_until_ready(_forward_ref(words, targets, embed_table, head_params))
    assert loss.shape == (B,)
    assert jnp.allclose(loss, ref, rtol=2e-2, atol=1e-1), (loss, ref)

    print("KERNEL_OK")
</pallas_src>

<mosaic_0001>
module attributes {stable_mosaic.version = 11 : i64} {
  func.func @_fc_logsoftmax_kernel(%arg0: i32, %arg1: memref<16x32xbf16, #tpu.memory_space<vmem>>, %arg2: memref<32x128xbf16, #tpu.memory_space<vmem>>, %arg3: memref<1x128xf32, #tpu.memory_space<vmem>>, %arg4: memref<16x128xbf16, #tpu.memory_space<vmem>>) attributes {dimension_semantics = [#tpu.dimension_semantics<parallel>], iteration_bounds = array<i64: 1>, scalar_prefetch = 0 : i64, scratch_operands = 0 : i64, tpu.core_type = #tpu.core_type<tc>, window_params = [{transform_indices = @transform_0, window_bounds = array<i64: 16, 32>}, {pipeline_mode = #tpu.pipeline_mode<synchronous>, transform_indices = @transform_1, window_bounds = array<i64: 32, 128>}, {pipeline_mode = #tpu.pipeline_mode<synchronous>, transform_indices = @transform_2, window_bounds = array<i64: 1, 128>}, {transform_indices = @transform_3, window_bounds = array<i64: 16, 128>}]} {
    %c0 = arith.constant 0 : index
    %c0_0 = arith.constant 0 : index
    %0 = vector.load %arg1[%c0, %c0_0] : memref<16x32xbf16, #tpu.memory_space<vmem>>, vector<16x32xbf16>
    %c0_1 = arith.constant 0 : index
    %c0_2 = arith.constant 0 : index
    %1 = vector.load %arg2[%c0_1, %c0_2] : memref<32x128xbf16, #tpu.memory_space<vmem>>, vector<32x128xbf16>
    %cst = arith.constant dense<0.000000e+00> : vector<16x128xf32>
    %2 = tpu.matmul %0, %1, %cst {dimension_numbers = #tpu.dot_dimension_numbers<[1], [0], [0], [1], [0, 0, 1, 1], [], []>} : vector<16x32xbf16>, vector<32x128xbf16>, vector<16x128xf32> -> vector<16x128xf32>
    %c0_3 = arith.constant 0 : index
    %c0_4 = arith.constant 0 : index
    %3 = vector.load %arg3[%c0_3, %c0_4] : memref<1x128xf32, #tpu.memory_space<vmem>>, vector<1x128xf32>
    %4 = vector.broadcast %3 : vector<1x128xf32> to vector<16x128xf32>
    %5 = arith.addf %2, %4 : vector<16x128xf32>
    %6 = tpu.iota {dimensions = array<i32: 1>} : vector<16x128xi32>
    %cst_5 = arith.constant 0.000000e+00 : f32
    %7 = vector.broadcast %cst_5 : f32 to vector<16x128xf32>
    %c0_i32 = arith.constant 0 : i32
    %8 = vector.broadcast %c0_i32 : i32 to vector<16x128xi32>
    %9 = arith.cmpi sge, %6, %8 : vector<16x128xi32>
    %c5_i32 = arith.constant 5 : i32
    %10 = vector.broadcast %c5_i32 : i32 to vector<16x128xi32>
    %11 = arith.cmpi slt, %6, %10 : vector<16x128xi32>
    %12 = arith.andi %9, %11 : vector<16x128xi1>
    %cst_6 = arith.constant -1.000000e+30 : f32
    %13 = vector.broadcast %cst_6 : f32 to vector<16x128xf32>
    %14 = arith.select %12, %5, %13 : vector<16x128xi1>, vector<16x128xf32>
    %cst_7 = arith.constant dense<0xFF800000> : vector<16xf32>
    %15 = vector.multi_reduction <maximumf>, %14, %cst_7 [1] : vector<16x128xf32> to vector<16xf32>
    %16 = vector.shape_cast %15 : vector<16xf32> to vector<16x1xf32>
    %17 = vector.shape_cast %16 : vector<16x1xf32> to vector<16x1xf32>
    %18 = vector.broadcast %17 : vector<16x1xf32> to vector<16x128xf32>
    %19 = arith.select %12, %18, %7 : vector<16x128xi1>, vector<16x128xf32>
    %c5_i32_8 = arith.constant 5 : i32
    %20 = vector.broadcast %c5_i32_8 : i32 to vector<16x128xi32>
    %21 = arith.cmpi sge, %6, %20 : vector<16x128xi32>
    %c12_i32 = arith.constant 12 : i32
    %22 = vector.broadcast %c12_i32 : i32 to vector<16x128xi32>
    %23 = arith.cmpi slt, %6, %22 : vector<16x128xi32>
    %24 = arith.andi %21, %23 : vector<16x128xi1>
    %cst_9 = arith.constant -1.000000e+30 : f32
    %25 = vector.broadcast %cst_9 : f32 to vector<16x128xf32>
    %26 = arith.select %24, %5, %25 : vector<16x128xi1>, vector<16x128xf32>
    %cst_10 = arith.constant dense<0xFF800000> : vector<16xf32>
    %27 = vector.multi_reduction <maximumf>, %26, %cst_10 [1] : vector<16x128xf32> to vector<16xf32>
    %28 = vector.shape_cast %27 : vector<16xf32> to vector<16x1xf32>
    %29 = vector.shape_cast %28 : vector<16x1xf32> to vector<16x1xf32>
    %30 = vector.broadcast %29 : vector<16x1xf32> to vector<16x128xf32>
    %31 = arith.select %24, %30, %19 : vector<16x128xi1>, vector<16x128xf32>
    %32 = arith.subf %5, %31 : vector<16x128xf32>
    %33 = math.exp %32 : vector<16x128xf32>
    %cst_11 = arith.constant 0.000000e+00 : f32
    %34 = vector.broadcast %cst_11 : f32 to vector<16x128xf32>
    %cst_12 = arith.constant 0.000000e+00 : f32
    %35 = vector.broadcast %cst_12 : f32 to vector<16x128xf32>
    %36 = arith.select %12, %33, %35 : vector<16x128xi1>, vector<16x128xf32>
    %cst_13 = arith.constant dense<0.000000e+00> : vector<16xf32>
    %37 = vector.multi_reduction <add>, %36, %cst_13 [1] : vector<16x128xf32> to vector<16xf32>
    %38 = vector.shape_cast %37 : vector<16xf32> to vector<16x1xf32>
    %39 = math.log %38 : vector<16x1xf32>
    %40 = arith.addf %16, %39 : vector<16x1xf32>
    %41 = vector.broadcast %40 : vector<16x1xf32> to vector<16x128xf32>
    %42 = arith.subf %5, %41 : vector<16x128xf32>
    %43 = arith.select %12, %42, %34 : vector<16x128xi1>, vector<16x128xf32>
    %cst_14 = arith.constant 0.000000e+00 : f32
    %44 = vector.broadcast %cst_14 : f32 to vector<16x128xf32>
    %45 = arith.select %24, %33, %44 : vector<16x128xi1>, vector<16x128xf32>
    %cst_15 = arith.constant dense<0.000000e+00> : vector<16xf32>
    %46 = vector.multi_reduction <add>, %45, %cst_15 [1] : vector<16x128xf32> to vector<16xf32>
    %47 = vector.shape_cast %46 : vector<16xf32> to vector<16x1xf32>
    %48 = math.log %47 : vector<16x1xf32>
    %49 = arith.addf %28, %48 : vector<16x1xf32>
    %50 = vector.broadcast %49 : vector<16x1xf32> to vector<16x128xf32>
    %51 = arith.subf %5, %50 : vector<16x128xf32>
    %52 = arith.select %24, %51, %43 : vector<16x128xi1>, vector<16x128xf32>
    %53 = arith.truncf %52 : vector<16x128xf32> to vector<16x128xbf16>
    %c0_16 = arith.constant 0 : index
    %c0_17 = arith.constant 0 : index
    %54 = vector.load %arg4[%c0_16, %c0_17] : memref<16x128xbf16, #tpu.memory_space<vmem>>, vector<16x128xbf16>
    tpu.vector_store %arg4[%c0_16, %c0_17], %53 {strides = array<i32>} : memref<16x128xbf16, #tpu.memory_space<vmem>>, vector<16x128xbf16>,
    return
  }
  func.func @transform_0(%arg0: i32) -> (i32, i32) {
    %c0_i32 = arith.constant 0 : i32
    %c0_i32_0 = arith.constant 0 : i32
    return %arg0, %c0_i32 : i32, i32
  }
  func.func @transform_1(%arg0: i32) -> (i32, i32) {
    %c0_i32 = arith.constant 0 : i32
    %c0_i32_0 = arith.constant 0 : i32
    %c0_i32_1 = arith.constant 0 : i32
    return %c0_i32, %c0_i32_0 : i32, i32
  }
  func.func @transform_2(%arg0: i32) -> (i32, i32) {
    %c0_i32 = arith.constant 0 : i32
    %c0_i32_0 = arith.constant 0 : i32
    %c0_i32_1 = arith.constant 0 : i32
    return %c0_i32, %c0_i32_0 : i32, i32
  }
  func.func @transform_3(%arg0: i32) -> (i32, i32) {
    %c0_i32 = arith.constant 0 : i32
    %c0_i32_0 = arith.constant 0 : i32
    return %arg0, %c0_i32 : i32, i32
  }
}

</mosaic_0001>

<llo_original>
// kernel: tpu_custom_call.1
$region0: #{tpu_custom_call.1}
  #allocation0 [shape = 'u32[]', space=smem, size = 0x4, offset = 0x4, fixed_abs, tag = 'smem constant byte address 0x4 - core index']
  #allocation1 [shape = 'u32[144,128]{1,0:T(1,128)}', space=vmem, size = 0x12000, scoped, tag = 'internal scratch']
  %s0 = inlined_call_operand.hbm [shape: bf16[16,32], index: 0, kind: input, shape index: {}]
  %s1 = inlined_call_operand.hbm [shape: bf16[32,128], index: 1, kind: input, shape index: {}]
  %s2 = inlined_call_operand.vmem [shape: f32[1,128], index: 2, kind: input, shape index: {}]
  %s3 = inlined_call_operand.hbm [shape: bf16[16,128], index: 3, kind: output, shape index: {}]
  %s4 = sld [smem:[#allocation0]]
  $region30: #{tpu_custom_call.1} parent=0
    _
  %s6 = ssub.s32 1, %s4
  %s7 = scalar_select 0, %s6, %s4
  $region1: #{tpu_custom_call.1} parent=0
    #allocation2 [shape = 'u8[4096]{0}', space=vmem, size = 0x1000, scoped, tag = 'input window, operand 0, single buffered']
    #allocation3 [shape = 's32[1]{0}', space=sflag, size = 0x4, scoped, tag = 'scoped memory for tpu_custom_call.1']
    #allocation4 [shape = 's32[1]{0}', space=sflag, size = 0x4, scoped, tag = 'scoped memory for tpu_custom_call.1']
    #allocation5 [shape = 'u8[8192]{0}', space=vmem, size = 0x2000, scoped, tag = 'input window, operand 1, single buffered']
    #allocation6 [shape = 's32[1]{0}', space=sflag, size = 0x4, scoped, tag = 'scoped memory for tpu_custom_call.1']
    #allocation7 [shape = 'u8[4096]{0}', space=vmem, size = 0x1000, scoped, tag = 'output window, operand 0, single buffered']
    %8 = vsyncpa [#allocation3], 0
    %9 = vsyncpa [#allocation6], 0
    %10 = vsyncpa [#allocation4], 0
    // Predicated region
    $region2: #{tpu_custom_call.1} parent=1 // pred_check
      _
    $region3: #{tpu_custom_call.1} parent=1 // pred_check_branch
      %12 = sbr.rel (0) target = $region5
    $region4: #{tpu_custom_call.1} parent=1 // pred_region
      %s14 = ssub.s32 128, 128
      %15 = vsyncadd [#allocation3], %s14
      %s16 = sshll.u32 [#allocation2], 4
      %s17 = int_to_ptr.vmem [resolvable:$true] %s16
      %22 = dma.hbm_to_vmem [thread:$0]  %s0, 128, %s17, [#allocation3], 64, 64, 4
    $region5: #{tpu_custom_call.1} parent=1 // pred_fallthru
      _
    // Predicated region
    $region6: #{tpu_custom_call.1} parent=1 // pred_check
      _
    $region7: #{tpu_custom_call.1} parent=1 // pred_check_branch
      %24 = sbr.rel (0) target = $region9
    $region8: #{tpu_custom_call.1} parent=1 // pred_region
      %s26 = ssub.s32 256, 256
      %27 = vsyncadd [#allocation6], %s26
      %s28 = sshll.u32 [#allocation5], 4
      %s29 = int_to_ptr.vmem [resolvable:$true] %s28
      %34 = dma.hbm_to_vmem [thread:$0]  %s1, 256, %s29, [#allocation6], 64, 64, 4
    $region9: #{tpu_custom_call.1} parent=1 // pred_fallthru
      _
    // Predicated region
    $region10: #{tpu_custom_call.1} parent=1 // pred_check
      _
    $region11: #{tpu_custom_call.1} parent=1 // pred_check_branch
      %36 = sbr.rel (0) target = $region13
    $region12: #{tpu_custom_call.1} parent=1 // pred_region
      _
    $region13: #{tpu_custom_call.1} parent=1 // pred_fallthru
      _
    // Predicated region
    $region14: #{tpu_custom_call.1} parent=1 // pred_check
      _
    $region15: #{tpu_custom_call.1} parent=1 // pred_check_branch
      %38 = sbr.rel (0) target = $region17
    $region16: #{tpu_custom_call.1} parent=1 // pred_region
      %39 = dma.done [#allocation3], 128
    $region17: #{tpu_custom_call.1} parent=1 // pred_fallthru
      _
    // Predicated region
    $region18: #{tpu_custom_call.1} parent=1 // pred_check
      _
    $region19: #{tpu_custom_call.1} parent=1 // pred_check_branch
      %41 = sbr.rel (0) target = $region21
    $region20: #{tpu_custom_call.1} parent=1 // pred_region
      %42 = dma.done [#allocation6], 256
    $region21: #{tpu_custom_call.1} parent=1 // pred_fallthru
      _
    %v44 = vld [vmem:[#allocation2] sm:$0xf]
    %v45 = vld [vmem:[#allocation2 + $0x4] sm:$0xf]
    %v46 = vld [vmem:[#allocation5] sm:$0xf]
    %v47 = vld [vmem:[#allocation5 + $0x4] sm:$0xf]
    %v48 = vld [vmem:[#allocation5 + $0x8] sm:$0xf]
    %v49 = vld [vmem:[#allocation5 + $0xc] sm:$0xf]
    %v50 = vld [vmem:[%s2] sm:$0x1]
    %v52 = vlaneseq
    %v53 = vshrl.u32 %v52, 7
    %v54 = vsub.s32 0, %v53
    %v55 = vrot.slane %v50, %v54
    %v59 = vunpack.c.l.b16 %v44
    %v60 = vunpack.c.l.b16 %v45
    %v61 = vpack.c.b16 %v60, %v59
    %v66 = vunpack.c.l.b16 %v46
    %v67 = vunpack.c.l.b16 %v47
    %v68 = vunpack.c.l.b16 %v48
    %v69 = vunpack.c.l.b16 %v49
    %v70 = vpack.c.b16 %v67, %v66
    %v71 = vpack.c.b16 %v69, %v68
    %vm74 = vcmask 261120
    %v76 = vsel %vm74, %v61, 0
    %78 = vmatprep.subr.bf16.mxu0 0
    %79 = vmatpush1.bf16.msra.mxu0 %v70
    %80 = vmatprep.subr.bf16.mxu0 0
    %81 = vmatpush1.bf16.msra.mxu0 %v71
    %82 = vmatprep.subr.bf16.mxu0 0
    %83 = vmatpush1.bf16.msra.mxu0 0
    %84 = vmatprep.subr.bf16.mxu0 0
    %85 = vmatpush1.bf16.msra.mxu0 0
    %86 = vmatprep.subr.bf16.mxu0 0
    %87 = vmatpush1.bf16.msra.mxu0 0
    %88 = vmatprep.subr.bf16.mxu0 0
    %89 = vmatpush1.bf16.msra.mxu0 0
    %90 = vmatprep.subr.bf16.mxu0 0
    %91 = vmatpush1.bf16.msra.mxu0 0
    %92 = vmatprep.subr.bf16.mxu0 0
    %93 = vmatpush1.bf16.msra.mxu0 0
    %94 = vmatprep.subr.bf16.mxu0 0
    %95 = vmatpush1.bf16.msra.mxu0 0
    %96 = vmatprep.subr.bf16.mxu0 0
    %97 = vmatpush1.bf16.msra.mxu0 0
    %98 = vmatprep.subr.bf16.mxu0 0
    %99 = vmatpush1.bf16.msra.mxu0 0
    %100 = vmatprep.subr.bf16.mxu0 0
    %101 = vmatpush1.bf16.msra.mxu0 0
    %102 = vmatprep.subr.bf16.mxu0 0
    %103 = vmatpush1.bf16.msra.mxu0 0
    %104 = vmatprep.subr.bf16.mxu0 0
    %105 = vmatpush1.bf16.msra.mxu0 0
    %106 = vmatprep.subr.bf16.mxu0 0
    %107 = vmatpush1.bf16.msra.mxu0 0
    %108 = vmatprep.subr.bf16.mxu0 0
    %109 = vmatpush1.bf16.msra.mxu0 0
    %110 = vmatprep.mubr.bf16.mxu0 0
    %111 = vmatmul.mubr.bf16.gmra.mrb[0].mxu0 %v76
    %v112 = vpop.f32.mrb[0].mxu0
    %v113 = vadd.f32 %v55, %v112
    %v114 = vpop.f32.mrb[0].mxu0
    %v115 = vpop.f32.mrb[0].mxu0
    %v116 = vadd.f32 %v55, %v115
    %v117 = vpop.f32.mrb[0].mxu0
    %118 = vdwg.mxu0
    %v119 = vlaneseq
    %v120 = vand.u32 %v119, 127
    %vm121 = vcmp.ge.s32.totalorder %v120, 0
    %vm122 = vcmp.lt.s32.totalorder %v120, 5
    %vm123 = vmand %vm121, %vm122
    %v124 = vsel %vm123, %v113, -1e+30
    %v125 = vsel %vm123, %v116, -1e+30
    %126 = vmax.xlane.f32.xlu0 %v124
    %v127 = vpop.xlane.xlu0 %126
    %128 = vmax.xlane.f32.xlu0 %v125
    %v129 = vpop.xlane.xlu0 %128
    %v130 = vsel %vm123, %v127, 0.0
    %v131 = vsel %vm123, %v129, 0.0
    %vm132 = vcmp.ge.s32.totalorder %v120, 5
    %vm133 = vcmp.lt.s32.totalorder %v120, 12
    %vm134 = vmand %vm132, %vm133
    %v135 = vsel %vm134, %v113, -1e+30
    %v136 = vsel %vm134, %v116, -1e+30
    %137 = vmax.xlane.f32.xlu0 %v135
    %v138 = vpop.xlane.xlu0 %137
    %139 = vmax.xlane.f32.xlu0 %v136
    %v140 = vpop.xlane.xlu0 %139
    %v141 = vsel %vm134, %v138, %v130
    %v142 = vsel %vm134, %v140, %v131
    %v143 = vsub.f32 %v113, %v141
    %v144 = vsub.f32 %v116, %v142
    %v145 = vmul.f32 %v143, 1.442695
    %v146 = vpow.pop %v145
    %v147 = vmul.f32 %v144, 1.442695
    %v148 = vpow.pop %v147
    %v149 = vsel %vm123, %v146, 0.0
    %v150 = vsel %vm123, %v148, 0.0
    %151 = vadd.xlane.f32.xlu0 %v149
    %v152 = vpop.xlane.xlu0 %151
    %153 = vadd.xlane.f32.xlu0 %v150
    %v154 = vpop.xlane.xlu0 %153
    %v155 = vlog2.pop %v152
    %v156 = vmul.f32 %v155, 0.6931472
    %v157 = vlog2.pop %v154
    %v158 = vmul.f32 %v157, 0.6931472
    %v159 = vadd.f32 %v127, %v156
    %v160 = vadd.f32 %v129, %v158
    %v161 = vsub.f32 %v113, %v159
    %v162 = vsub.f32 %v116, %v160
    %v163 = vsel %vm123, %v161, 0.0
    %v164 = vsel %vm123, %v162, 0.0
    %v165 = vsel %vm134, %v146, 0.0
    %v166 = vsel %vm134, %v148, 0.0
    %167 = vadd.xlane.f32.xlu0 %v165
    %v168 = vpop.xlane.xlu0 %167
    %169 = vadd.xlane.f32.xlu0 %v166
    %v170 = vpop.xlane.xlu0 %169
    %v171 = vlog2.pop %v168
    %v172 = vmul.f32 %v171, 0.6931472
    %v173 = vlog2.pop %v170
    %v174 = vmul.f32 %v173, 0.6931472
    %v175 = vadd.f32 %v138, %v172
    %v176 = vadd.f32 %v140, %v174
    %v177 = vsub.f32 %v113, %v175
    %v178 = vsub.f32 %v116, %v176
    %v179 = vsel %vm134, %v177, %v163
    %v180 = vsel %vm134, %v178, %v164
    %v181 = vpack.c.bf16 %v180, %v179
    %v183 = vunpack.c.l.b16 %v181
    %v184 = vunpack.c.h.b16 %v181
    %v185 = vpack.c.b16 %v183, %v183
    %v186 = vpack.c.b16 %v184, %v184
    %189 = vst [vmem:[#allocation7] sm:$0xf] %v185
    %190 = vst [vmem:[#allocation7 + $0x4] sm:$0xf] %v186
    // Predicated region
    $region22: #{tpu_custom_call.1} parent=1 // pred_check
      _
    $region23: #{tpu_custom_call.1} parent=1 // pred_check_branch
      %192 = sbr.rel (0) target = $region25
    $region24: #{tpu_custom_call.1} parent=1 // pred_region
      %s194 = ssub.s32 128, 128
      %195 = vsyncadd [#allocation4], %s194
      %s196 = sshll.u32 [#allocation7], 4
      %s197 = int_to_ptr.vmem [resolvable:$true] %s196
      %202 = dma.vmem_to_hbm [thread:$0]  %s197, 128, %s3, [#allocation4], 64, 64, 4
    $region25: #{tpu_custom_call.1} parent=1 // pred_fallthru
      _
    // Predicated region
    $region26: #{tpu_custom_call.1} parent=1 // pred_check
      _
    $region27: #{tpu_custom_call.1} parent=1 // pred_check_branch
      %204 = sbr.rel (0) target = $region29
    $region28: #{tpu_custom_call.1} parent=1 // pred_region
      %205 = dma.done [#allocation4], 128
    $region29: #{tpu_custom_call.1} parent=1 // pred_fallthru
      _
    %206 = vsyncpa [#allocation3], 1
    %207 = vsyncpa [#allocation6], 1
    %208 = vsyncpa [#allocation4], 1

</llo_original>
